<compile_context>
chip_gen: v6e
topology: v6e:2x2x1
jax: 0.10.0
libtpu: 0.0.40
codegen_flags: <defaults>
</compile_context>

<pallas_src>
import jax
import jax.numpy as jnp
from jax.experimental import pallas as pl
from jax.experimental.pallas import tpu as pltpu


def _round_up(x, m):
    return (x + m - 1) // m * m


def mliap_kernel(x_ref, shift_ref, w1_ref, w1t_ref, b1_ref, w2row_ref,
                 energy_ref, beta_ref):
    """One row-tile of atoms: forward energy + closed-form dE/dx (beta)."""
    x = x_ref[...]            # (TN, Dp)  descriptors (lane-padded)
    w1 = w1_ref[...]          # (Dp, Hp)
    b1 = b1_ref[...]          # (1,  Hp)
    w2r = w2row_ref[...]      # (1,  Hp)  second-layer weights as a row

    # hidden layer (MXU): h = tanh(x @ W1 + b1)
    h = jnp.tanh(jnp.dot(x, w1, preferred_element_type=jnp.float32) + b1)

    # per-atom energy.  A (TN,Hp)@(Hp,1) matmul wastes a full MXU pass on a
    # 1-wide output; multiply + lane reduce runs on otherwise idle VPU/XLU.
    e_mlp = jnp.sum(h * w2r, axis=-1, keepdims=True)             # (TN, 1)
    energy_ref[...] = e_mlp + shift_ref[...]                      # + elem bias + b2

    # beta = dE/dx = ((1 - h^2) * w2^T) @ W1^T   (W1^T precomputed on host;
    # element bias has zero descriptor gradient)
    g = (1.0 - h * h) * w2r                                       # (TN, Hp)
    beta_ref[...] = jnp.dot(g, w1t_ref[...],
                            preferred_element_type=jnp.float32)


def _choose_row_tiling(n, tile_n):
    """Pick a sublane-aligned row tile that keeps >= 2 grid steps when possible."""
    if n > 8:
        n_tiles = max(2, pl.cdiv(n, int(tile_n)))   # dual-TC (v7x) when N allows
    else:
        n_tiles = 1
    tn = max(8, _round_up(pl.cdiv(n, n_tiles), 8))   # multiple of 8 sublanes
    n_pad = _round_up(n, tn)
    return tn, n_pad


def torch_wrapper_forward(elems, descriptors, params, *, tile_n=256):
    """Pallas equivalent of TorchWrapper.forward.

    elems:       (N,) int element types (1-based, as lammps provides)
    descriptors: (N, D) float
    params:      (W1 (D,H), b1 (1,H), W2 (H,1), b2 (1,1), ebias (1,NE))
    Returns (energy (N,), beta (N, D)) instead of writing into out-arrays.
    """
    w1, b1, w2, b2, ebias = params
    n, d = descriptors.shape
    h = w1.shape[1]
    ne = ebias.shape[1]

    # --- lane padding: round D, H to multiples of 128 so both matmuls and the
    # beta writeback are lane-dense.  Zero padding is exact.
    dp = _round_up(d, 128)
    hp = _round_up(h, 128)

    w1p = jnp.zeros((dp, hp), jnp.float32).at[:d, :h].set(w1.astype(jnp.float32))
    w1tp = w1p.T                                       # transposed once, outside kernel
    b1p = jnp.zeros((1, hp), jnp.float32).at[:, :h].set(b1.astype(jnp.float32))
    w2row = jnp.zeros((1, hp), jnp.float32).at[0, :h].set(w2[:, 0].astype(jnp.float32))

    # --- element energy shift hoisted out of the kernel (tiny gather over N
    # scalars); fold scalar b2 in as well so neither needs its own VMEM block.
    elems0 = jnp.clip(elems.astype(jnp.int32) - 1, 0, ne - 1)     # torch: elems - 1
    shift_vec = jnp.take(ebias[0].astype(jnp.float32), elems0) \
        + b2.astype(jnp.float32)[0, 0]

    # --- row tiling (sublane-aligned, ragged N supported via zero-pad rows)
    tn, n_pad = _choose_row_tiling(n, tile_n)

    x = jnp.zeros((n_pad, dp), jnp.float32).at[:n, :d].set(
        descriptors.astype(jnp.float32))
    shift = jnp.zeros((n_pad, 1), jnp.float32).at[:n, 0].set(shift_vec)

    grid = (n_pad // tn,)
    energy_p, beta_p = pl.pallas_call(
        mliap_kernel,
        out_shape=(
            jax.ShapeDtypeStruct((n_pad, 1), jnp.float32),
            jax.ShapeDtypeStruct((n_pad, dp), jnp.float32),
        ),
        grid_spec=pltpu.PrefetchScalarGridSpec(
            num_scalar_prefetch=0,
            grid=grid,
            in_specs=[
                pl.BlockSpec((tn, dp), lambda i: (i, 0)),    # descriptors tile
                pl.BlockSpec((tn, 1), lambda i: (i, 0)),     # elem-bias + b2 shift
                pl.BlockSpec((dp, hp), lambda i: (0, 0)),    # W1 (padded, resident)
                pl.BlockSpec((hp, dp), lambda i: (0, 0)),    # W1^T (padded, resident)
                pl.BlockSpec((1, hp), lambda i: (0, 0)),     # b1
                pl.BlockSpec((1, hp), lambda i: (0, 0)),     # w2 as a row
            ],
            out_specs=[
                pl.BlockSpec((tn, 1), lambda i: (i, 0)),     # energy (tiny writeback)
                pl.BlockSpec((tn, dp), lambda i: (i, 0)),    # beta (lane-dense)
            ],
        ),
        compiler_params=pltpu.CompilerParams(
            dimension_semantics=("parallel",)),
    )(x, shift, w1p, w1tp, b1p, w2row)

    # torch: energy_nn flattened to 1-D; strip padding (rows and lanes).
    return energy_p[:n, 0], beta_p[:n, :d]


def make_params(key, n_descriptors, hidden, n_elements):
    k1, k2, k3, k4, k5 = jax.random.split(key, 5)
    w1 = jax.random.normal(k1, (n_descriptors, hidden), jnp.float32) * 0.1
    b1 = jax.random.normal(k2, (1, hidden), jnp.float32) * 0.1
    w2 = jax.random.normal(k3, (hidden, 1), jnp.float32) * 0.1
    b2 = jax.random.normal(k4, (1, 1), jnp.float32) * 0.1
    ebias = jax.random.normal(k5, (1, n_elements), jnp.float32) * 0.1
    return (w1, b1, w2, b2, ebias)


def _reference(elems, descriptors, params):
    """Pure-JAX reference replicating the torch autograd semantics (f32)."""
    w1, b1, w2, b2, ebias = params
    e0 = elems.astype(jnp.int32) - 1

    def total_energy(x):
        h = jnp.tanh(x @ w1 + b1)
        e = (h @ w2 + b2)[:, 0] + ebias[0][e0]
        return e.sum(), e

    (_, energy), beta = jax.value_and_grad(total_energy, has_aux=True)(
        descriptors.astype(jnp.float32))
    return energy, beta


if __name__ == "__main__":
    # Small, deterministic example (non-multiple atom count exercises the
    # ragged-N path; D/H below 128 exercise the lane-padding path).
    N_ATOMS = 70
    N_DESCRIPTORS = 32
    HIDDEN = 32
    N_ELEMENTS = 4

    key = jax.random.PRNGKey(0)
    kp, kd, ke = jax.random.split(key, 3)

    params = make_params(kp, N_DESCRIPTORS, HIDDEN, N_ELEMENTS)
    descriptors = jax.random.normal(kd, (N_ATOMS, N_DESCRIPTORS), jnp.float32)
    elems = jax.random.randint(ke, (N_ATOMS,), 1, N_ELEMENTS + 1, jnp.int32)

    fwd = jax.jit(lambda e, x: torch_wrapper_forward(e, x, params))
    energy, beta = fwd(elems, descriptors)
    jax.block_until_ready((energy, beta))

    e_ref, b_ref = _reference(elems, descriptors, params)
    assert energy.shape == (N_ATOMS,)
    assert beta.shape == (N_ATOMS, N_DESCRIPTORS)
    assert jnp.allclose(energy, e_ref, atol=1e-4, rtol=1e-4)
    assert jnp.allclose(beta, b_ref, atol=1e-4, rtol=1e-4)

    print("KERNEL_OK")
</pallas_src>

<mosaic_0001>
module attributes {stable_mosaic.version = 11 : i64} {
  func.func @mliap_kernel(%arg0: i32, %arg1: memref<40x128xf32, #tpu.memory_space<vmem>>, %arg2: memref<40x1xf32, #tpu.memory_space<vmem>>, %arg3: memref<128x128xf32, #tpu.memory_space<vmem>>, %arg4: memref<128x128xf32, #tpu.memory_space<vmem>>, %arg5: memref<1x128xf32, #tpu.memory_space<vmem>>, %arg6: memref<1x128xf32, #tpu.memory_space<vmem>>, %arg7: memref<40x1xf32, #tpu.memory_space<vmem>>, %arg8: memref<40x128xf32, #tpu.memory_space<vmem>>) attributes {dimension_semantics = [#tpu.dimension_semantics<parallel>], iteration_bounds = array<i64: 2>, scalar_prefetch = 0 : i64, scratch_operands = 0 : i64, tpu.core_type = #tpu.core_type<tc>, window_params = [{transform_indices = @transform_0, window_bounds = array<i64: 40, 128>}, {transform_indices = @transform_1, window_bounds = array<i64: 40, 1>}, {pipeline_mode = #tpu.pipeline_mode<synchronous>, transform_indices = @transform_2, window_bounds = array<i64: 128, 128>}, {pipeline_mode = #tpu.pipeline_mode<synchronous>, transform_indices = @transform_3, window_bounds = array<i64: 128, 128>}, {pipeline_mode = #tpu.pipeline_mode<synchronous>, transform_indices = @transform_4, window_bounds = array<i64: 1, 128>}, {pipeline_mode = #tpu.pipeline_mode<synchronous>, transform_indices = @transform_5, window_bounds = array<i64: 1, 128>}, {transform_indices = @transform_6, window_bounds = array<i64: 40, 1>}, {transform_indices = @transform_7, window_bounds = array<i64: 40, 128>}]} {
    %c0 = arith.constant 0 : index
    %c0_0 = arith.constant 0 : index
    %0 = vector.load %arg1[%c0, %c0_0] : memref<40x128xf32, #tpu.memory_space<vmem>>, vector<40x128xf32>
    %c0_1 = arith.constant 0 : index
    %c0_2 = arith.constant 0 : index
    %1 = vector.load %arg3[%c0_1, %c0_2] : memref<128x128xf32, #tpu.memory_space<vmem>>, vector<128x128xf32>
    %c0_3 = arith.constant 0 : index
    %c0_4 = arith.constant 0 : index
    %2 = vector.load %arg5[%c0_3, %c0_4] : memref<1x128xf32, #tpu.memory_space<vmem>>, vector<1x128xf32>
    %c0_5 = arith.constant 0 : index
    %c0_6 = arith.constant 0 : index
    %3 = vector.load %arg6[%c0_5, %c0_6] : memref<1x128xf32, #tpu.memory_space<vmem>>, vector<1x128xf32>
    %cst = arith.constant dense<0.000000e+00> : vector<40x128xf32>
    %4 = tpu.matmul %0, %1, %cst {dimension_numbers = #tpu.dot_dimension_numbers<[1], [0], [0], [1], [0, 0, 1, 1], [], []>} : vector<40x128xf32>, vector<128x128xf32>, vector<40x128xf32> -> vector<40x128xf32>
    %5 = vector.broadcast %2 : vector<1x128xf32> to vector<40x128xf32>
    %6 = arith.addf %4, %5 : vector<40x128xf32>
    %7 = math.tanh %6 : vector<40x128xf32>
    %8 = vector.broadcast %3 : vector<1x128xf32> to vector<40x128xf32>
    %9 = arith.mulf %7, %8 : vector<40x128xf32>
    %cst_7 = arith.constant dense<0.000000e+00> : vector<40xf32>
    %10 = vector.multi_reduction <add>, %9, %cst_7 [1] : vector<40x128xf32> to vector<40xf32>
    %11 = vector.shape_cast %10 : vector<40xf32> to vector<40x1xf32>
    %c0_8 = arith.constant 0 : index
    %c0_9 = arith.constant 0 : index
    %12 = vector.load %arg2[%c0_8, %c0_9] : memref<40x1xf32, #tpu.memory_space<vmem>>, vector<40x1xf32>
    %13 = arith.addf %11, %12 : vector<40x1xf32>
    %c0_10 = arith.constant 0 : index
    %c0_11 = arith.constant 0 : index
    %14 = vector.load %arg7[%c0_10, %c0_11] : memref<40x1xf32, #tpu.memory_space<vmem>>, vector<40x1xf32>
    tpu.vector_store %arg7[%c0_10, %c0_11], %13 {strides = array<i32>} : memref<40x1xf32, #tpu.memory_space<vmem>>, vector<40x1xf32>,
    %15 = arith.mulf %7, %7 : vector<40x128xf32>
    %cst_12 = arith.constant 1.000000e+00 : f32
    %16 = vector.broadcast %cst_12 : f32 to vector<40x128xf32>
    %17 = arith.subf %16, %15 : vector<40x128xf32>
    %18 = vector.broadcast %3 : vector<1x128xf32> to vector<40x128xf32>
    %19 = arith.mulf %17, %18 : vector<40x128xf32>
    %c0_13 = arith.constant 0 : index
    %c0_14 = arith.constant 0 : index
    %20 = vector.load %arg4[%c0_13, %c0_14] : memref<128x128xf32, #tpu.memory_space<vmem>>, vector<128x128xf32>
    %cst_15 = arith.constant dense<0.000000e+00> : vector<40x128xf32>
    %21 = tpu.matmul %19, %20, %cst_15 {dimension_numbers = #tpu.dot_dimension_numbers<[1], [0], [0], [1], [0, 0, 1, 1], [], []>} : vector<40x128xf32>, vector<128x128xf32>, vector<40x128xf32> -> vector<40x128xf32>
    %c0_16 = arith.constant 0 : index
    %c0_17 = arith.constant 0 : index
    %22 = vector.load %arg8[%c0_16, %c0_17] : memref<40x128xf32, #tpu.memory_space<vmem>>, vector<40x128xf32>
    tpu.vector_store %arg8[%c0_16, %c0_17], %21 {strides = array<i32>} : memref<40x128xf32, #tpu.memory_space<vmem>>, vector<40x128xf32>,
    return
  }
  func.func @transform_0(%arg0: i32) -> (i32, i32) {
    %c0_i32 = arith.constant 0 : i32
    %c0_i32_0 = arith.constant 0 : i32
    return %arg0, %c0_i32 : i32, i32
  }
  func.func @transform_1(%arg0: i32) -> (i32, i32) {
    %c0_i32 = arith.constant 0 : i32
    %c0_i32_0 = arith.constant 0 : i32
    return %arg0, %c0_i32 : i32, i32
  }
  func.func @transform_2(%arg0: i32) -> (i32, i32) {
    %c0_i32 = arith.constant 0 : i32
    %c0_i32_0 = arith.constant 0 : i32
    %c0_i32_1 = arith.constant 0 : i32
    return %c0_i32, %c0_i32_0 : i32, i32
  }
  func.func @transform_3(%arg0: i32) -> (i32, i32) {
    %c0_i32 = arith.constant 0 : i32
    %c0_i32_0 = arith.constant 0 : i32
    %c0_i32_1 = arith.constant 0 : i32
    return %c0_i32, %c0_i32_0 : i32, i32
  }
  func.func @transform_4(%arg0: i32) -> (i32, i32) {
    %c0_i32 = arith.constant 0 : i32
    %c0_i32_0 = arith.constant 0 : i32
    %c0_i32_1 = arith.constant 0 : i32
    return %c0_i32, %c0_i32_0 : i32, i32
  }
  func.func @transform_5(%arg0: i32) -> (i32, i32) {
    %c0_i32 = arith.constant 0 : i32
    %c0_i32_0 = arith.constant 0 : i32
    %c0_i32_1 = arith.constant 0 : i32
    return %c0_i32, %c0_i32_0 : i32, i32
  }
  func.func @transform_6(%arg0: i32) -> (i32, i32) {
    %c0_i32 = arith.constant 0 : i32
    %c0_i32_0 = arith.constant 0 : i32
    return %arg0, %c0_i32 : i32, i32
  }
  func.func @transform_7(%arg0: i32) -> (i32, i32) {
    %c0_i32 = arith.constant 0 : i32
    %c0_i32_0 = arith.constant 0 : i32
    return %arg0, %c0_i32 : i32, i32
  }
}

</mosaic_0001>

<llo_original>
// kernel: _lambda_.1
$region0: #{_lambda_.1}
  #allocation0 [shape = 'u32[]', space=smem, size = 0x4, offset = 0x4, fixed_abs, tag = 'smem constant byte address 0x4 - core index']
  #allocation1 [shape = 'u32[144,128]{1,0:T(1,128)}', space=vmem, size = 0x12000, scoped, tag = 'internal scratch']
  %s0 = inlined_call_operand.vmem [shape: f32[80,128], index: 0, kind: input, shape index: {}]
  %s1 = inlined_call_operand.vmem [shape: f32[80,1], index: 1, kind: input, shape index: {}]
  %s2 = inlined_call_operand.vmem [shape: f32[128,128], index: 2, kind: input, shape index: {}]
  %s3 = inlined_call_operand.vmem [shape: f32[128,128], index: 3, kind: input, shape index: {}]
  %s4 = inlined_call_operand.vmem [shape: f32[1,128], index: 4, kind: input, shape index: {}]
  %s5 = inlined_call_operand.vmem [shape: f32[1,128], index: 5, kind: input, shape index: {}]
  %s6 = inlined_call_operand.vmem [shape: f32[80,1], index: 6, kind: output, shape index: {0}]
  %s7 = inlined_call_operand.vmem [shape: f32[80,128], index: 7, kind: output, shape index: {1}]
  %8 = xla_tuple %s6, %s7
  %s9 = sld [smem:[#allocation0]]
  $region65: #{_lambda_.1} parent=0
    _
  %s11 = ssub.s32 1, %s9
  %s12 = scalar_select 0, %s11, %s9
  loop: start=0, step=1, limit=4
  $region2: #{_lambda_.1} parent=0 // loop_pre_header
    _
  $region3: #{_lambda_.1} parent=0 // loop_header
    %s14 = sphi 0, %s18
    %p15 = scmp.ge.s32.totalorder %s14, 4
    %s24 = sphi 0, %s26
    %s27 = sphi 0, %s24
    %s28 = sphi 0, %s27
    %s44 = sphi 0, %s28
    %s50 = sphi 0, %s52
    %s53 = sphi 0, %s50
    %s54 = sphi 0, %s53
    %s70 = sphi 0, %s54
    %s74 = sphi 0, %s74
    %s76 = sphi 0, %s74
    %s77 = sphi 0, %s76
    %s91 = sphi 0, %s77
    %s95 = sphi 0, %s95
    %s97 = sphi 0, %s95
    %s98 = sphi 0, %s97
    %s112 = sphi 0, %s98
    %s116 = sphi 0, %s116
    %s118 = sphi 0, %s116
    %s119 = sphi 0, %s118
    %s133 = sphi 0, %s119
    %s137 = sphi 0, %s137
    %s139 = sphi 0, %s137
    %s140 = sphi 0, %s139
    %s154 = sphi 0, %s140
    %s160 = sphi 0, %s162
    %s163 = sphi 0, %s160
    %s164 = sphi 0, %s163
    %s180 = sphi 0, %s164
    %s186 = sphi 0, %s188
    %s189 = sphi 0, %s186
    %s190 = sphi 0, %s189
    %s206 = sphi 0, %s190
  $region4: #{_lambda_.1} parent=0 // loop_header_branch
    %17 = sbr.rel (%p15) target = $region8
  $region5: #{_lambda_.1} parent=0 // loop_body
    %s19 = ssub.s32 %s14, 1
    %s20 = ssub.s32 %s14, 2
    %s21 = sadd.s32 %s14, 1
    %s22 = ssub.s32 %s14, %s21
    %p23 = scmp.eq.s32.totalorder %s22, 0
    %s25 = sadd.s32 %s24, 1
    %s26 = scalar_select %p23, %s24, %s25
    %p29 = pneg %p23
    %p30 = scmp.eq.s32.totalorder %s14, 1
    %p31 = por %p29, %p30
    %p32 = scmp.ne.s32.totalorder %s24, %s27
    %p33 = scmp.eq.s32.totalorder %s14, 0
    %p34 = por %p32, %p33
    %p35 = scmp.ne.s32.totalorder %s24, %s27
    %p36 = scmp.eq.s32.totalorder %s19, 1
    %p37 = por %p35, %p36
    %p38 = scmp.ne.s32.totalorder %s27, %s28
    %p39 = scmp.eq.s32.totalorder %s19, 0
    %p40 = por %p38, %p39
    %p41 = scmp.ne.s32.totalorder %s27, %s28
    %p42 = scmp.eq.s32.totalorder %s20, 1
    %p43 = por %p41, %p42
    %p45 = scmp.ne.s32.totalorder %s28, %s44
    %p46 = scmp.eq.s32.totalorder %s20, 0
    %p47 = por %p45, %p46
    %s48 = ssub.s32 %s14, %s21
    %p49 = scmp.eq.s32.totalorder %s48, 0
    %s51 = sadd.s32 %s50, 1
    %s52 = scalar_select %p49, %s50, %s51
    %p55 = pneg %p49
    %p56 = scmp.eq.s32.totalorder %s14, 1
    %p57 = por %p55, %p56
    %p58 = scmp.ne.s32.totalorder %s50, %s53
    %p59 = scmp.eq.s32.totalorder %s14, 0
    %p60 = por %p58, %p59
    %p61 = scmp.ne.s32.totalorder %s50, %s53
    %p62 = scmp.eq.s32.totalorder %s19, 1
    %p63 = por %p61, %p62
    %p64 = scmp.ne.s32.totalorder %s53, %s54
    %p65 = scmp.eq.s32.totalorder %s19, 0
    %p66 = por %p64, %p65
    %p67 = scmp.ne.s32.totalorder %s53, %s54
    %p68 = scmp.eq.s32.totalorder %s20, 1
    %p69 = por %p67, %p68
    %p71 = scmp.ne.s32.totalorder %s54, %s70
    %p72 = scmp.eq.s32.totalorder %s20, 0
    %p73 = por %p71, %p72
    %s75 = sadd.s32 %s74, 1
    %p78 = scmp.eq.s32.totalorder %s14, 1
    %p79 = scmp.ne.s32.totalorder %s74, %s76
    %p80 = scmp.eq.s32.totalorder %s14, 0
    %p81 = por %p79, %p80
    %p82 = scmp.ne.s32.totalorder %s74, %s76
    %p83 = scmp.eq.s32.totalorder %s19, 1
    %p84 = por %p82, %p83
    %p85 = scmp.ne.s32.totalorder %s76, %s77
    %p86 = scmp.eq.s32.totalorder %s19, 0
    %p87 = por %p85, %p86
    %p88 = scmp.ne.s32.totalorder %s76, %s77
    %p89 = scmp.eq.s32.totalorder %s20, 1
    %p90 = por %p88, %p89
    %p92 = scmp.ne.s32.totalorder %s77, %s91
    %p93 = scmp.eq.s32.totalorder %s20, 0
    %p94 = por %p92, %p93
    %s96 = sadd.s32 %s95, 1
    %p99 = scmp.eq.s32.totalorder %s14, 1
    %p100 = scmp.ne.s32.totalorder %s95, %s97
    %p101 = scmp.eq.s32.totalorder %s14, 0
    %p102 = por %p100, %p101
    %p103 = scmp.ne.s32.totalorder %s95, %s97
    %p104 = scmp.eq.s32.totalorder %s19, 1
    %p105 = por %p103, %p104
    %p106 = scmp.ne.s32.totalorder %s97, %s98
    %p107 = scmp.eq.s32.totalorder %s19, 0
    %p108 = por %p106, %p107
    %p109 = scmp.ne.s32.totalorder %s97, %s98
    %p110 = scmp.eq.s32.totalorder %s20, 1
    %p111 = por %p109, %p110
    %p113 = scmp.ne.s32.totalorder %s98, %s112
    %p114 = scmp.eq.s32.totalorder %s20, 0
    %p115 = por %p113, %p114
    %s117 = sadd.s32 %s116, 1
    %p120 = scmp.eq.s32.totalorder %s14, 1
    %p121 = scmp.ne.s32.totalorder %s116, %s118
    %p122 = scmp.eq.s32.totalorder %s14, 0
    %p123 = por %p121, %p122
    %p124 = scmp.ne.s32.totalorder %s116, %s118
    %p125 = scmp.eq.s32.totalorder %s19, 1
    %p126 = por %p124, %p125
    %p127 = scmp.ne.s32.totalorder %s118, %s119
    %p128 = scmp.eq.s32.totalorder %s19, 0
    %p129 = por %p127, %p128
    %p130 = scmp.ne.s32.totalorder %s118, %s119
    %p131 = scmp.eq.s32.totalorder %s20, 1
    %p132 = por %p130, %p131
    %p134 = scmp.ne.s32.totalorder %s119, %s133
    %p135 = scmp.eq.s32.totalorder %s20, 0
    %p136 = por %p134, %p135
    %s138 = sadd.s32 %s137, 1
    %p141 = scmp.eq.s32.totalorder %s14, 1
    %p142 = scmp.ne.s32.totalorder %s137, %s139
    %p143 = scmp.eq.s32.totalorder %s14, 0
    %p144 = por %p142, %p143
    %p145 = scmp.ne.s32.totalorder %s137, %s139
    %p146 = scmp.eq.s32.totalorder %s19, 1
    %p147 = por %p145, %p146
    %p148 = scmp.ne.s32.totalorder %s139, %s140
    %p149 = scmp.eq.s32.totalorder %s19, 0
    %p150 = por %p148, %p149
    %p151 = scmp.ne.s32.totalorder %s139, %s140
    %p152 = scmp.eq.s32.totalorder %s20, 1
    %p153 = por %p151, %p152
    %p155 = scmp.ne.s32.totalorder %s140, %s154
    %p156 = scmp.eq.s32.totalorder %s20, 0
    %p157 = por %p155, %p156
    %s158 = ssub.s32 %s14, %s21
    %p159 = scmp.eq.s32.totalorder %s158, 0
    %s161 = sadd.s32 %s160, 1
    %s162 = scalar_select %p159, %s160, %s161
    %p165 = pneg %p159
    %p166 = scmp.eq.s32.totalorder %s14, 1
    %p167 = por %p165, %p166
    %p168 = scmp.ne.s32.totalorder %s160, %s163
    %p169 = scmp.eq.s32.totalorder %s14, 0
    %p170 = por %p168, %p169
    %p171 = scmp.ne.s32.totalorder %s160, %s163
    %p172 = scmp.eq.s32.totalorder %s19, 1
    %p173 = por %p171, %p172
    %p174 = scmp.ne.s32.totalorder %s163, %s164
    %p175 = scmp.eq.s32.totalorder %s19, 0
    %p176 = por %p174, %p175
    %p177 = scmp.ne.s32.totalorder %s163, %s164
    %p178 = scmp.eq.s32.totalorder %s20, 1
    %p179 = por %p177, %p178
    %p181 = scmp.ne.s32.totalorder %s164, %s180
    %p182 = scmp.eq.s32.totalorder %s20, 0
    %p183 = por %p181, %p182
    %s184 = ssub.s32 %s14, %s21
    %p185 = scmp.eq.s32.totalorder %s184, 0
    %s187 = sadd.s32 %s186, 1
    %s188 = scalar_select %p185, %s186, %s187
    %p191 = pneg %p185
    %p192 = scmp.eq.s32.totalorder %s14, 1
    %p193 = por %p191, %p192
    %p194 = scmp.ne.s32.totalorder %s186, %s189
    %p195 = scmp.eq.s32.totalorder %s14, 0
    %p196 = por %p194, %p195
    %p197 = scmp.ne.s32.totalorder %s186, %s189
    %p198 = scmp.eq.s32.totalorder %s19, 1
    %p199 = por %p197, %p198
    %p200 = scmp.ne.s32.totalorder %s189, %s190
    %p201 = scmp.eq.s32.totalorder %s19, 0
    %p202 = por %p200, %p201
    %p203 = scmp.ne.s32.totalorder %s189, %s190
    %p204 = scmp.eq.s32.totalorder %s20, 1
    %p205 = por %p203, %p204
    %p207 = scmp.ne.s32.totalorder %s190, %s206
    %p208 = scmp.eq.s32.totalorder %s20, 0
    %p209 = por %p207, %p208
    %p210 = scmp.le.s32.totalorder 1, %s14
    %p211 = scmp.lt.s32.totalorder %s14, 3
    %p212 = pnand %p210, %p211
    %p213 = pneg %p212
    // Predicated region
    $region9: #{_lambda_.1} parent=5 // pred_check
      _
    $region10: #{_lambda_.1} parent=5 // pred_check_branch
      %215 = sbr.rel (%p212) target = $region12
    $region11: #{_lambda_.1} parent=5 // pred_region
      %s216 = ssub.s32 %s14, 1
      // Predicated region
      $region13: #{_lambda_.1} parent=11 // pred_check
        %p217 = pneg %p87
      $region14: #{_lambda_.1} parent=11 // pred_check_branch
        %219 = sbr.rel (%p217) target = $region16
      $region15: #{_lambda_.1} parent=11 // pred_region
        _
      $region16: #{_lambda_.1} parent=11 // pred_fallthru
        _
      // Predicated region
      $region17: #{_lambda_.1} parent=11 // pred_check
        %p220 = pneg %p108
      $region18: #{_lambda_.1} parent=11 // pred_check_branch
        %222 = sbr.rel (%p220) target = $region20
      $region19: #{_lambda_.1} parent=11 // pred_region
        _
      $region20: #{_lambda_.1} parent=11 // pred_fallthru
        _
      // Predicated region
      $region21: #{_lambda_.1} parent=11 // pred_check
        %p223 = pneg %p129
      $region22: #{_lambda_.1} parent=11 // pred_check_branch
        %225 = sbr.rel (%p223) target = $region24
      $region23: #{_lambda_.1} parent=11 // pred_region
        _
      $region24: #{_lambda_.1} parent=11 // pred_fallthru
        _
      // Predicated region
      $region25: #{_lambda_.1} parent=11 // pred_check
        %p226 = pneg %p150
      $region26: #{_lambda_.1} parent=11 // pred_check_branch
        %228 = sbr.rel (%p226) target = $region28
      $region27: #{_lambda_.1} parent=11 // pred_region
        _
      $region28: #{_lambda_.1} parent=11 // pred_fallthru
        _
    $region12: #{_lambda_.1} parent=5 // pred_fallthru
      _
    %p229 = scmp.lt.s32.totalorder %s14, 2
    // Predicated region
    $region29: #{_lambda_.1} parent=5 // pred_check
      %p230 = pneg %p229
    $region30: #{_lambda_.1} parent=5 // pred_check_branch
      %232 = sbr.rel (%p230) target = $region32
    $region31: #{_lambda_.1} parent=5 // pred_region
      // Predicated region
      $region33: #{_lambda_.1} parent=31 // pred_check
        %p233 = pneg %p34
      $region34: #{_lambda_.1} parent=31 // pred_check_branch
        %235 = sbr.rel (%p233) target = $region36
      $region35: #{_lambda_.1} parent=31 // pred_region
        %s236 = smul.u32 5, %s14
        %p237 = scmp.lt.s32.totalorder %s236, 9
        %s238 = scalar_select %p237, %s236, 9
        %s239 = smul.addr %s238, 8
        %s240 = scalar_lea.vmem %s0, %s239
        %s241 = smul.u32 5, %s14
      $region36: #{_lambda_.1} parent=31 // pred_fallthru
        _
      // Predicated region
      $region37: #{_lambda_.1} parent=31 // pred_check
        %p242 = pneg %p60
      $region38: #{_lambda_.1} parent=31 // pred_check_branch
        %244 = sbr.rel (%p242) target = $region40
      $region39: #{_lambda_.1} parent=31 // pred_region
        %s245 = smul.u32 5, %s14
        %p246 = scmp.lt.s32.totalorder %s245, 9
        %s247 = scalar_select %p246, %s245, 9
        %s248 = smul.addr %s247, 8
        %s249 = scalar_lea.vmem %s1, %s248
        %s250 = smul.u32 5, %s14
      $region40: #{_lambda_.1} parent=31 // pred_fallthru
        _
    $region32: #{_lambda_.1} parent=5 // pred_fallthru
      _
    %p251 = scmp.le.s32.totalorder 1, %s14
    %p252 = scmp.lt.s32.totalorder %s14, 3
    %p253 = pnand %p251, %p252
    %p254 = pneg %p253
    // Predicated region
    $region41: #{_lambda_.1} parent=5 // pred_check
      _
    $region42: #{_lambda_.1} parent=5 // pred_check_branch
      %256 = sbr.rel (%p253) target = $region44
    $region43: #{_lambda_.1} parent=5 // pred_region
      %s257 = ssub.s32 %s14, 1
      %s258 = smul.u32 5, %s19
      %p259 = scmp.lt.s32.totalorder %s258, 9
      %s260 = scalar_select %p259, %s258, 9
      %s261 = smul.addr %s260, 8
      %s262 = scalar_lea.vmem %s0, %s261
      %p263 = pneg %p40
      %p264 = pneg %p37
      %s265 = smul.u32 5, %s19
      %p266 = scmp.lt.s32.totalorder %s265, 9
      %s267 = scalar_select %p266, %s265, 9
      %s268 = smul.addr %s267, 8
      %s269 = scalar_lea.vmem %s1, %s268
      %p270 = pneg %p66
      %p271 = pneg %p63
      %p272 = pneg %p87
      %p273 = pneg %p84
      %p274 = pneg %p108
      %p275 = pneg %p105
      %p276 = pneg %p129
      %p277 = pneg %p126
      %p278 = pneg %p150
      %p279 = pneg %p147
      %p280 = pneg %p176
      %p281 = pneg %p173
      %s282 = smul.u32 5, %s19
      %p283 = scmp.lt.s32.totalorder %s282, 9
      %s284 = scalar_select %p283, %s282, 9
      %s285 = smul.addr %s284, 8
      %s286 = scalar_lea.vmem %s6, %s285
      %p287 = pneg %p202
      %p288 = pneg %p199
      %s289 = smul.u32 5, %s19
      %p290 = scmp.lt.s32.totalorder %s289, 9
      %s291 = scalar_select %p290, %s289, 9
      %s292 = smul.addr %s291, 8
      %s293 = scalar_lea.vmem %s7, %s292
      %s294 = smul.u32 5, %s19
      %p295 = scmp.lt.s32.totalorder %s294, 9
      %s296 = scalar_select %p295, %s294, 9
      %s297 = smul.addr %s296, 8
      %s298 = scalar_lea.vmem %s0, %s297
      %s299 = smul.u32 5, %s19
      %s300 = smul.u32 5, %s19
      %p301 = scmp.lt.s32.totalorder %s300, 9
      %s302 = scalar_select %p301, %s300, 9
      %s303 = smul.addr %s302, 8
      %s304 = scalar_lea.vmem %s1, %s303
      %s305 = smul.u32 5, %s19
      %s306 = smul.u32 5, %s19
      %p307 = scmp.lt.s32.totalorder %s306, 9
      %s308 = scalar_select %p307, %s306, 9
      %s309 = smul.addr %s308, 8
      %s310 = scalar_lea.vmem %s6, %s309
      %s311 = smul.u32 5, %s19
      %s312 = smul.u32 5, %s19
      %p313 = scmp.lt.s32.totalorder %s312, 9
      %s314 = scalar_select %p313, %s312, 9
      %s315 = smul.addr %s314, 8
      %s316 = scalar_lea.vmem %s7, %s315
      %s317 = smul.u32 5, %s19
      %v318 = vld [vmem:[%s298] sm:$0xff]
      %v319 = vld [vmem:[%s298 + $0x8] sm:$0xff]
      %v320 = vld [vmem:[%s298 + $0x10] sm:$0xff]
      %v321 = vld [vmem:[%s298 + $0x18] sm:$0xff]
      %v322 = vld [vmem:[%s298 + $0x20] sm:$0xff]
      %v323 = vld [vmem:[%s2] sm:$0xff]
      %v324 = vld [vmem:[%s2 + $0x8] sm:$0xff]
      %v325 = vld [vmem:[%s2 + $0x10] sm:$0xff]
      %v326 = vld [vmem:[%s2 + $0x18] sm:$0xff]
      %v327 = vld [vmem:[%s2 + $0x20] sm:$0xff]
      %v328 = vld [vmem:[%s2 + $0x28] sm:$0xff]
      %v329 = vld [vmem:[%s2 + $0x30] sm:$0xff]
      %v330 = vld [vmem:[%s2 + $0x38] sm:$0xff]
      %v331 = vld [vmem:[%s2 + $0x40] sm:$0xff]
      %v332 = vld [vmem:[%s2 + $0x48] sm:$0xff]
      %v333 = vld [vmem:[%s2 + $0x50] sm:$0xff]
      %v334 = vld [vmem:[%s2 + $0x58] sm:$0xff]
      %v335 = vld [vmem:[%s2 + $0x60] sm:$0xff]
      %v336 = vld [vmem:[%s2 + $0x68] sm:$0xff]
      %v337 = vld [vmem:[%s2 + $0x70] sm:$0xff]
      %v338 = vld [vmem:[%s2 + $0x78] sm:$0xff]
      %v339 = vld [vmem:[%s4] sm:$0x1]
      %v340 = vld [vmem:[%s5] sm:$0x1]
      %v342 = vlaneseq
      %v343 = vshrl.u32 %v342, 7
      %v344 = vsub.s32 0, %v343
      %v345 = vrot.slane %v339, %v344
      %347 = vmatprep.subr.mxu0 0.0
      %348 = vmatpush1.msra.mxu0 %v338
      %349 = vmatprep.subr.mxu0 0.0
      %350 = vmatpush1.msra.mxu0 %v337
      %351 = vmatprep.subr.mxu0 0.0
      %352 = vmatpush1.msra.mxu0 %v336
      %353 = vmatprep.subr.mxu0 0.0
      %354 = vmatpush1.msra.mxu0 %v335
      %355 = vmatprep.subr.mxu0 0.0
      %356 = vmatpush1.msra.mxu0 %v334
      %357 = vmatprep.subr.mxu0 0.0
      %358 = vmatpush1.msra.mxu0 %v333
      %359 = vmatprep.subr.mxu0 0.0
      %360 = vmatpush1.msra.mxu0 %v332
      %361 = vmatprep.subr.mxu0 0.0
      %362 = vmatpush1.msra.mxu0 %v331
      %363 = vmatprep.subr.mxu0 0.0
      %364 = vmatpush1.msra.mxu0 %v330
      %365 = vmatprep.subr.mxu0 0.0
      %366 = vmatpush1.msra.mxu0 %v329
      %367 = vmatprep.subr.mxu0 0.0
      %368 = vmatpush1.msra.mxu0 %v328
      %369 = vmatprep.subr.mxu0 0.0
      %370 = vmatpush1.msra.mxu0 %v327
      %371 = vmatprep.subr.mxu0 0.0
      %372 = vmatpush1.msra.mxu0 %v326
      %373 = vmatprep.subr.mxu0 0.0
      %374 = vmatpush1.msra.mxu0 %v325
      %375 = vmatprep.subr.mxu0 0.0
      %376 = vmatpush1.msra.mxu0 %v324
      %377 = vmatprep.subr.mxu0 0.0
      %378 = vmatpush1.msra.mxu0 %v323
      %379 = vmatprep.subr.mxu0 0.0
      %380 = vmatpush2.msra.mxu0 0.0
      %381 = vmatprep.subr.mxu0 0.0
      %382 = vmatpush2.msra.mxu0 0.0
      %383 = vmatprep.subr.mxu0 0.0
      %384 = vmatpush2.msra.mxu0 0.0
      %385 = vmatprep.subr.mxu0 0.0
      %386 = vmatpush2.msra.mxu0 0.0
      %387 = vmatprep.subr.mxu0 0.0
      %388 = vmatpush2.msra.mxu0 0.0
      %389 = vmatprep.subr.mxu0 0.0
      %390 = vmatpush2.msra.mxu0 0.0
      %391 = vmatprep.subr.mxu0 0.0
      %392 = vmatpush2.msra.mxu0 0.0
      %393 = vmatprep.subr.mxu0 0.0
      %394 = vmatpush2.msra.mxu0 0.0
      %395 = vmatprep.subr.mxu0 0.0
      %396 = vmatpush2.msra.mxu0 0.0
      %397 = vmatprep.subr.mxu0 0.0
      %398 = vmatpush2.msra.mxu0 0.0
      %399 = vmatprep.subr.mxu0 0.0
      %400 = vmatpush2.msra.mxu0 0.0
      %401 = vmatprep.subr.mxu0 0.0
      %402 = vmatpush2.msra.mxu0 0.0
      %403 = vmatprep.subr.mxu0 0.0
      %404 = vmatpush2.msra.mxu0 0.0
      %405 = vmatprep.subr.mxu0 0.0
      %406 = vmatpush2.msra.mxu0 0.0
      %407 = vmatprep.subr.mxu0 0.0
      %408 = vmatpush2.msra.mxu0 0.0
      %409 = vmatprep.subr.mxu0 0.0
      %410 = vmatpush2.msra.mxu0 0.0
      %411 = vmatprep.mubr.f32.mxu0 0.0
      %412 = vmatmul.mubr.f32.gmra.mxu0 %v318
      %v413 = vpop.f32.mrf.mxu0
      %v414 = vadd.f32 %v345, %v413
      %v415 = vpop.f32.mrf.mxu0
      %416 = vmatprep.mubr.f32.mxu0 0.0
      %417 = vmatmul.mubr.f32.gmra.mxu0 %v319
      %v418 = vpop.f32.mrf.mxu0
      %v419 = vadd.f32 %v345, %v418
      %v420 = vpop.f32.mrf.mxu0
      %421 = vmatprep.mubr.f32.mxu0 0.0
      %422 = vmatmul.mubr.f32.gmra.mxu0 %v320
      %v423 = vpop.f32.mrf.mxu0
      %v424 = vadd.f32 %v345, %v423
      %v425 = vpop.f32.mrf.mxu0
      %426 = vmatprep.mubr.f32.mxu0 0.0
      %427 = vmatmul.mubr.f32.gmra.mxu0 %v321
      %v428 = vpop.f32.mrf.mxu0
      %v429 = vadd.f32 %v345, %v428
      %v430 = vpop.f32.mrf.mxu0
      %431 = vmatprep.mubr.f32.mxu0 0.0
      %432 = vmatmul.mubr.f32.gmra.mxu0 %v322
      %v433 = vpop.f32.mrf.mxu0
      %v434 = vadd.f32 %v345, %v433
      %v435 = vpop.f32.mrf.mxu0
      %436 = vdwg.mxu0
      %v437 = vtanh.pop %v414
      %v438 = vtanh.pop %v419
      %v439 = vtanh.pop %v424
      %v440 = vtanh.pop %v429
      %v441 = vtanh.pop %v434
      %v443 = vlaneseq
      %v444 = vshrl.u32 %v443, 7
      %v445 = vsub.s32 0, %v444
      %v446 = vrot.slane %v340, %v445
      %v448 = vmul.f32 %v437, %v446
      %v449 = vmul.f32 %v438, %v446
      %v450 = vmul.f32 %v439, %v446
      %v451 = vmul.f32 %v440, %v446
      %v452 = vmul.f32 %v441, %v446
      %453 = vadd.xlane.f32.xlu0 %v448
      %v454 = vpop.xlane.xlu0 %453
      %455 = vadd.xlane.f32.xlu0 %v449
      %v456 = vpop.xlane.xlu0 %455
      %457 = vadd.xlane.f32.xlu0 %v450
      %v458 = vpop.xlane.xlu0 %457
      %459 = vadd.xlane.f32.xlu0 %v451
      %v460 = vpop.xlane.xlu0 %459
      %461 = vadd.xlane.f32.xlu0 %v452
      %v462 = vpop.xlane.xlu0 %461
      %v463 = vld [vmem:[%s304] sm:$0xff]
      %v464 = vld [vmem:[%s304 + $0x8] sm:$0xff]
      %v465 = vld [vmem:[%s304 + $0x10] sm:$0xff]
      %v466 = vld [vmem:[%s304 + $0x18] sm:$0xff]
      %v467 = vld [vmem:[%s304 + $0x20] sm:$0xff]
      %v468 = vadd.f32 %v454, %v463
      %v469 = vadd.f32 %v456, %v464
      %v470 = vadd.f32 %v458, %v465
      %v471 = vadd.f32 %v460, %v466
      %v472 = vadd.f32 %v462, %v467
      %vm473 = vcmask 7168
      %474 = vst.msk [vmem:[%s310] sm:$0xff] %vm473, %v468
      %475 = vst.msk [vmem:[%s310 + $0x8] sm:$0xff] %vm473, %v469
      %476 = vst.msk [vmem:[%s310 + $0x10] sm:$0xff] %vm473, %v470
      %477 = vst.msk [vmem:[%s310 + $0x18] sm:$0xff] %vm473, %v471
      %478 = vst.msk [vmem:[%s310 + $0x20] sm:$0xff] %vm473, %v472
      %v479 = vmul.f32 %v437, %v437
      %v480 = vmul.f32 %v438, %v438
      %v481 = vmul.f32 %v439, %v439
      %v482 = vmul.f32 %v440, %v440
      %v483 = vmul.f32 %v441, %v441
      %v484 = vsub.f32 1.0, %v479
      %v485 = vsub.f32 1.0, %v480
      %v486 = vsub.f32 1.0, %v481
      %v487 = vsub.f32 1.0, %v482
      %v488 = vsub.f32 1.0, %v483
      %v489 = vmul.f32 %v484, %v446
      %v490 = vmul.f32 %v485, %v446
      %v491 = vmul.f32 %v486, %v446
      %v492 = vmul.f32 %v487, %v446
      %v493 = vmul.f32 %v488, %v446
      %v494 = vld [vmem:[%s3] sm:$0xff]
      %v495 = vld [vmem:[%s3 + $0x8] sm:$0xff]
      %v496 = vld [vmem:[%s3 + $0x10] sm:$0xff]
      %v497 = vld [vmem:[%s3 + $0x18] sm:$0xff]
      %v498 = vld [vmem:[%s3 + $0x20] sm:$0xff]
      %v499 = vld [vmem:[%s3 + $0x28] sm:$0xff]
      %v500 = vld [vmem:[%s3 + $0x30] sm:$0xff]
      %v501 = vld [vmem:[%s3 + $0x38] sm:$0xff]
      %v502 = vld [vmem:[%s3 + $0x40] sm:$0xff]
      %v503 = vld [vmem:[%s3 + $0x48] sm:$0xff]
      %v504 = vld [vmem:[%s3 + $0x50] sm:$0xff]
      %v505 = vld [vmem:[%s3 + $0x58] sm:$0xff]
      %v506 = vld [vmem:[%s3 + $0x60] sm:$0xff]
      %v507 = vld [vmem:[%s3 + $0x68] sm:$0xff]
      %v508 = vld [vmem:[%s3 + $0x70] sm:$0xff]
      %v509 = vld [vmem:[%s3 + $0x78] sm:$0xff]
      %510 = vmatprep.subr.mxu0 0.0
      %511 = vmatpush1.msra.mxu0 %v509
      %512 = vmatprep.subr.mxu0 0.0
      %513 = vmatpush1.msra.mxu0 %v508
      %514 = vmatprep.subr.mxu0 0.0
      %515 = vmatpush1.msra.mxu0 %v507
      %516 = vmatprep.subr.mxu0 0.0
      %517 = vmatpush1.msra.mxu0 %v506
      %518 = vmatprep.subr.mxu0 0.0
      %519 = vmatpush1.msra.mxu0 %v505
      %520 = vmatprep.subr.mxu0 0.0
      %521 = vmatpush1.msra.mxu0 %v504
      %522 = vmatprep.subr.mxu0 0.0
      %523 = vmatpush1.msra.mxu0 %v503
      %524 = vmatprep.subr.mxu0 0.0
      %525 = vmatpush1.msra.mxu0 %v502
      %526 = vmatprep.subr.mxu0 0.0
      %527 = vmatpush1.msra.mxu0 %v501
      %528 = vmatprep.subr.mxu0 0.0
      %529 = vmatpush1.msra.mxu0 %v500
      %530 = vmatprep.subr.mxu0 0.0
      %531 = vmatpush1.msra.mxu0 %v499
      %532 = vmatprep.subr.mxu0 0.0
      %533 = vmatpush1.msra.mxu0 %v498
      %534 = vmatprep.subr.mxu0 0.0
      %535 = vmatpush1.msra.mxu0 %v497
      %536 = vmatprep.subr.mxu0 0.0
      %537 = vmatpush1.msra.mxu0 %v496
      %538 = vmatprep.subr.mxu0 0.0
      %539 = vmatpush1.msra.mxu0 %v495
      %540 = vmatprep.subr.mxu0 0.0
      %541 = vmatpush1.msra.mxu0 %v494
      %542 = vmatprep.subr.mxu0 0.0
      %543 = vmatpush2.msra.mxu0 0.0
      %544 = vmatprep.subr.mxu0 0.0
      %545 = vmatpush2.msra.mxu0 0.0
      %546 = vmatprep.subr.mxu0 0.0
      %547 = vmatpush2.msra.mxu0 0.0
      %548 = vmatprep.subr.mxu0 0.0
      %549 = vmatpush2.msra.mxu0 0.0
      %550 = vmatprep.subr.mxu0 0.0
      %551 = vmatpush2.msra.mxu0 0.0
      %552 = vmatprep.subr.mxu0 0.0
      %553 = vmatpush2.msra.mxu0 0.0
      %554 = vmatprep.subr.mxu0 0.0
      %555 = vmatpush2.msra.mxu0 0.0
      %556 = vmatprep.subr.mxu0 0.0
      %557 = vmatpush2.msra.mxu0 0.0
      %558 = vmatprep.subr.mxu0 0.0
      %559 = vmatpush2.msra.mxu0 0.0
      %560 = vmatprep.subr.mxu0 0.0
      %561 = vmatpush2.msra.mxu0 0.0
      %562 = vmatprep.subr.mxu0 0.0
      %563 = vmatpush2.msra.mxu0 0.0
      %564 = vmatprep.subr.mxu0 0.0
      %565 = vmatpush2.msra.mxu0 0.0
      %566 = vmatprep.subr.mxu0 0.0
      %567 = vmatpush2.msra.mxu0 0.0
      %568 = vmatprep.subr.mxu0 0.0
      %569 = vmatpush2.msra.mxu0 0.0
      %570 = vmatprep.subr.mxu0 0.0
      %571 = vmatpush2.msra.mxu0 0.0
      %572 = vmatprep.subr.mxu0 0.0
      %573 = vmatpush2.msra.mxu0 0.0
      %574 = vmatprep.mubr.f32.mxu0 0.0
      %575 = vmatmul.mubr.f32.gmra.mxu0 %v489
      %v576 = vpop.f32.mrf.mxu0
      %v577 = vadd.f32 0.0, %v576
      %v578 = vpop.f32.mrf.mxu0
      %579 = vmatprep.mubr.f32.mxu0 0.0
      %580 = vmatmul.mubr.f32.gmra.mxu0 %v490
      %v581 = vpop.f32.mrf.mxu0
      %v582 = vadd.f32 0.0, %v581
      %v583 = vpop.f32.mrf.mxu0
      %584 = vmatprep.mubr.f32.mxu0 0.0
      %585 = vmatmul.mubr.f32.gmra.mxu0 %v491
      %v586 = vpop.f32.mrf.mxu0
      %v587 = vadd.f32 0.0, %v586
      %v588 = vpop.f32.mrf.mxu0
      %589 = vmatprep.mubr.f32.mxu0 0.0
      %590 = vmatmul.mubr.f32.gmra.mxu0 %v492
      %v591 = vpop.f32.mrf.mxu0
      %v592 = vadd.f32 0.0, %v591
      %v593 = vpop.f32.mrf.mxu0
      %594 = vmatprep.mubr.f32.mxu0 0.0
      %595 = vmatmul.mubr.f32.gmra.mxu0 %v493
      %v596 = vpop.f32.mrf.mxu0
      %v597 = vadd.f32 0.0, %v596
      %v598 = vpop.f32.mrf.mxu0
      %599 = vdwg.mxu0
      %600 = vst [vmem:[%s316] sm:$0xff] %v577
      %601 = vst [vmem:[%s316 + $0x8] sm:$0xff] %v582
      %602 = vst [vmem:[%s316 + $0x10] sm:$0xff] %v587
      %603 = vst [vmem:[%s316 + $0x18] sm:$0xff] %v592
      %604 = vst [vmem:[%s316 + $0x20] sm:$0xff] %v597
      %s605 = smul.u32 5, %s19
      %p606 = scmp.lt.s32.totalorder %s605, 9
      %s607 = scalar_select %p606, %s605, 9
      %s608 = smul.addr %s607, 8
      %s609 = scalar_lea.vmem %s6, %s608
      %s610 = smul.u32 5, %s19
      %p611 = scmp.lt.s32.totalorder %s610, 9
      %s612 = scalar_select %p611, %s610, 9
      %s613 = smul.addr %s612, 8
      %s614 = scalar_lea.vmem %s7, %s613
      // Predicated region
      $region45: #{_lambda_.1} parent=43 // pred_check
        %p615 = pneg %p173
      $region46: #{_lambda_.1} parent=43 // pred_check_branch
        %617 = sbr.rel (%p615) target = $region48
      $region47: #{_lambda_.1} parent=43 // pred_region
        %s618 = smul.u32 5, %s19
      $region48: #{_lambda_.1} parent=43 // pred_fallthru
        _
      // Predicated region
      $region49: #{_lambda_.1} parent=43 // pred_check
        %p619 = pneg %p199
      $region50: #{_lambda_.1} parent=43 // pred_check_branch
        %621 = sbr.rel (%p619) target = $region52
      $region51: #{_lambda_.1} parent=43 // pred_region
        %s622 = smul.u32 5, %s19
      $region52: #{_lambda_.1} parent=43 // pred_fallthru
        _
    $region44: #{_lambda_.1} parent=5 // pred_fallthru
      _
    %p623 = scmp.le.s32.totalorder 2, %s14
    // Predicated region
    $region53: #{_lambda_.1} parent=5 // pred_check
      %p624 = pneg %p623
    $region54: #{_lambda_.1} parent=5 // pred_check_branch
      %626 = sbr.rel (%p624) target = $region56
    $region55: #{_lambda_.1} parent=5 // pred_region
      %s627 = ssub.s32 %s14, 2
      // Predicated region
      $region57: #{_lambda_.1} parent=55 // pred_check
        %p628 = pneg %p179
      $region58: #{_lambda_.1} parent=55 // pred_check_branch
        %630 = sbr.rel (%p628) target = $region60
      $region59: #{_lambda_.1} parent=55 // pred_region
        %s631 = smul.u32 5, %s20
        %p632 = scmp.lt.s32.totalorder %s631, 9
        %s633 = scalar_select %p632, %s631, 9
        %s634 = smul.addr %s633, 8
        %s635 = scalar_lea.vmem %s6, %s634
      $region60: #{_lambda_.1} parent=55 // pred_fallthru
        _
      // Predicated region
      $region61: #{_lambda_.1} parent=55 // pred_check
        %p636 = pneg %p205
      $region62: #{_lambda_.1} parent=55 // pred_check_branch
        %638 = sbr.rel (%p636) target = $region64
      $region63: #{_lambda_.1} parent=55 // pred_region
        %s639 = smul.u32 5, %s20
        %p640 = scmp.lt.s32.totalorder %s639, 9
        %s641 = scalar_select %p640, %s639, 9
        %s642 = smul.addr %s641, 8
        %s643 = scalar_lea.vmem %s7, %s642
      $region64: #{_lambda_.1} parent=55 // pred_fallthru
        _
    $region56: #{_lambda_.1} parent=5 // pred_fallthru
      _
  $region6: #{_lambda_.1} parent=0 // loop_footer
    %s18 = sadd.s32 1, %s14
  $region7: #{_lambda_.1} parent=0 // loop_footer_branch
    %13 = sbr.rel target = $region3
  $region8: #{_lambda_.1} parent=0 // loop_exit
    _

</llo_original>
